<compile_context>
chip_gen: v6e
topology: v6e:2x2x1
jax: 0.10.0
libtpu: 0.0.40
codegen_flags: <defaults>
</compile_context>

<pallas_src>
import functools
import math

import jax
import jax.numpy as jnp
from jax.experimental import pallas as pl
from jax.experimental.pallas import tpu as pltpu

RANK = 5
_SMALL_INPUT_BYTES = 256 * 1024   # below this, pooled stats run in plain JAX


# --------------------------------------------------------------------------- #
# Hardware-aware sizing helpers
# --------------------------------------------------------------------------- #
@functools.lru_cache(maxsize=1)
def _vmem_capacity_bytes():
    """Physical VMEM per core (generation-aware); conservative fallback."""
    try:
        info = pltpu.get_tpu_info()
        for name in ("vmem_capacity_bytes", "vmem_size_bytes", "vmem_bytes"):
            v = getattr(info, name, None)
            if v:
                return int(v)
    except Exception:
        pass
    return 64 << 20            # v7x-style conservative default (64 MiB / TC)


def _tile_budget_bytes():
    # ~4 MiB input tiles on v7x (64 MiB VMEM), ~8 MiB on v5e/v6e (128 MiB).
    cap = _vmem_capacity_bytes()
    return int(min(8 << 20, max(2 << 20, cap // 16)))


def _vmem_limit_bytes():
    cap = _vmem_capacity_bytes()
    return int(max(32 << 20, min(cap * 3 // 4, 96 << 20)))


def _sublane_multiple(dtype):
    # f32 -> 8, bf16/f16 -> 16, int8/fp8 -> 32 (keeps packed layouts legal).
    return max(8, 32 // jnp.dtype(dtype).itemsize)


def _largest_divisor(n, target, multiple, prefer_split=False):
    """Largest d <= target with n % d == 0 and d % multiple == 0.
    With prefer_split, additionally try to keep n // d >= 2 so the parallel
    grid axis has work for both v7x TensorCores.  Falls back to the full dim
    n (a block equal to the full dim is always legal)."""
    def search(cap):
        best, d = None, multiple
        cap = min(n, cap)
        while d <= cap:
            if n % d == 0:
                best = d
            d += multiple
        return best

    if prefer_split and n >= 2 * multiple:
        best = search(min(target, n // 2))
        if best is not None:
            return best
    best = search(target)
    return best if best is not None else n


def _pick_lane_block(total, rows_per_block, prefer_split=False):
    """Lane-axis (last-dim) block: a multiple of 128 (or the full dim), sized
    so an f32 tile of (rows_per_block, block) stays under the tile budget."""
    budget_elems = _tile_budget_bytes() // 4
    target = max(128, budget_elems // max(1, rows_per_block))
    return _largest_divisor(total, target, 128, prefer_split=prefer_split)


def _ws_ok(ws_bytes):
    return ws_bytes <= (_vmem_limit_bytes() * 9) // 10


# --------------------------------------------------------------------------- #
# Pass A: per-(channel, pixel) max / sum over the slice axis.
#   x3: (N, C, HW)  ->  max_nc, sum_nc : (C, HW)   (f32)
# --------------------------------------------------------------------------- #
def _nc_stats_kernel(x_ref, max_ref, sum_ref):
    x = x_ref[...].astype(jnp.float32)          # (BN, C, BHW), f32 math in-kernel
    tile_max = jnp.max(x, axis=0)               # (C, BHW)
    tile_sum = jnp.sum(x, axis=0)

    @pl.when(pl.program_id(1) == 0)             # first step along the slice axis
    def _():
        max_ref[...] = tile_max
        sum_ref[...] = tile_sum

    @pl.when(pl.program_id(1) != 0)
    def _():
        max_ref[...] = jnp.maximum(max_ref[...], tile_max)
        sum_ref[...] = sum_ref[...] + tile_sum


def nc_stats(x3):
    N, C, HW = x3.shape
    isz = x3.dtype.itemsize
    budget = _tile_budget_bytes()
    bhw = _pick_lane_block(HW, C, prefer_split=True)      # parallel axis: HW
    bn = _largest_divisor(N, max(1, budget // max(1, C * bhw * isz)), 1)
    # working set: double-buffered input tile + 2 f32 accumulators (x2 buffers)
    ws = 2 * bn * C * bhw * isz + 4 * C * bhw * 4
    if not _ws_ok(ws):                                    # awkward shape -> jnp
        xf = x3.astype(jnp.float32)
        return jnp.max(xf, axis=0), jnp.sum(xf, axis=0)

    grid = (HW // bhw, N // bn)                           # reduction axis last
    bytes_accessed = N * C * HW * isz + 2 * C * HW * 4
    return pl.pallas_call(
        _nc_stats_kernel,
        out_shape=[jax.ShapeDtypeStruct((C, HW), jnp.float32),
                   jax.ShapeDtypeStruct((C, HW), jnp.float32)],
        grid_spec=pltpu.PrefetchScalarGridSpec(
            num_scalar_prefetch=0,
            grid=grid,
            in_specs=[pl.BlockSpec((bn, C, bhw), lambda h, n: (n, 0, h))],
            out_specs=[pl.BlockSpec((C, bhw), lambda h, n: (0, h)),
                       pl.BlockSpec((C, bhw), lambda h, n: (0, h))],
        ),
        compiler_params=pltpu.CompilerParams(
            dimension_semantics=("parallel", "arbitrary"),
            vmem_limit_bytes=_vmem_limit_bytes()),
        cost_estimate=pl.CostEstimate(flops=2 * N * C * HW, transcendentals=0,
                                      bytes_accessed=bytes_accessed),
    )(x3)


# --------------------------------------------------------------------------- #
# Pass B: per-slice max / sum of x * gate  (gate = a_c (x) p_hw, shape (1, D)).
#   x2: (N, D)  ->  slice_max, slice_sum : (N, 1)   (f32)
# --------------------------------------------------------------------------- #
def _slice_stats_kernel(x_ref, g_ref, max_ref, sum_ref):
    y = x_ref[...].astype(jnp.float32) * g_ref[...]   # (BN, BD) * (1, BD)
    tile_max = jnp.max(y, axis=1, keepdims=True)      # (BN, 1)
    tile_sum = jnp.sum(y, axis=1, keepdims=True)

    @pl.when(pl.program_id(1) == 0)
    def _():
        max_ref[...] = tile_max
        sum_ref[...] = tile_sum

    @pl.when(pl.program_id(1) != 0)
    def _():
        max_ref[...] = jnp.maximum(max_ref[...], tile_max)
        sum_ref[...] = sum_ref[...] + tile_sum


def slice_stats(x2, gate):
    N, D = x2.shape
    isz = x2.dtype.itemsize
    mult = _sublane_multiple(x2.dtype)
    bn = _largest_divisor(N, 256, mult, prefer_split=True)   # parallel axis: N
    bd = _pick_lane_block(D, bn)
    ws = 2 * bn * bd * isz + 2 * bd * 4 + 4 * bn * 4
    if not _ws_ok(ws):                                       # awkward shape -> jnp
        y = x2.astype(jnp.float32) * gate
        return (jnp.max(y, axis=1, keepdims=True),
                jnp.sum(y, axis=1, keepdims=True))

    grid = (N // bn, D // bd)                                # reduction axis last
    bytes_accessed = N * D * isz + D * 4 + 2 * N * 4
    return pl.pallas_call(
        _slice_stats_kernel,
        out_shape=[jax.ShapeDtypeStruct((N, 1), jnp.float32),
                   jax.ShapeDtypeStruct((N, 1), jnp.float32)],
        grid_spec=pltpu.PrefetchScalarGridSpec(
            num_scalar_prefetch=0,
            grid=grid,
            in_specs=[pl.BlockSpec((bn, bd), lambda i, j: (i, j)),
                      pl.BlockSpec((1, bd), lambda i, j: (0, j))],
            out_specs=[pl.BlockSpec((bn, 1), lambda i, j: (i, 0)),
                       pl.BlockSpec((bn, 1), lambda i, j: (i, 0))],
        ),
        compiler_params=pltpu.CompilerParams(
            dimension_semantics=("parallel", "arbitrary"),
            vmem_limit_bytes=_vmem_limit_bytes()),
        cost_estimate=pl.CostEstimate(flops=3 * N * D, transcendentals=0,
                                      bytes_accessed=bytes_accessed),
    )(x2, gate)


# --------------------------------------------------------------------------- #
# Pass C: out = x * gate * slice_gate, lane-dense streaming, native dtype out.
# --------------------------------------------------------------------------- #
def _apply_kernel(x_ref, g_ref, s_ref, o_ref):
    y = x_ref[...].astype(jnp.float32) * g_ref[...] * s_ref[...]
    o_ref[...] = y.astype(o_ref.dtype)


def apply_gates(x2, gate, slice_gate):
    N, D = x2.shape
    isz = x2.dtype.itemsize
    mult = _sublane_multiple(x2.dtype)
    bn = _largest_divisor(N, 256, mult)
    bd = _pick_lane_block(D, bn, prefer_split=True)          # split lanes for v7x
    ws = 4 * bn * bd * isz + 2 * bd * 4 + 2 * bn * 4         # in + out, double-buffered
    if not _ws_ok(ws):                                       # awkward shape -> jnp
        y = x2.astype(jnp.float32) * gate * slice_gate
        return y.astype(x2.dtype)

    grid = (N // bn, D // bd)
    bytes_accessed = 2 * N * D * isz + D * 4 + N * 4
    # TODO(synk): if a profile shows exposed DMA turnaround here, add
    #             pipeline_mode=pl.Buffered(3) on the x BlockSpec (VMEM permitting).
    return pl.pallas_call(
        _apply_kernel,
        out_shape=jax.ShapeDtypeStruct((N, D), x2.dtype),
        grid_spec=pltpu.PrefetchScalarGridSpec(
            num_scalar_prefetch=0,
            grid=grid,
            in_specs=[pl.BlockSpec((bn, bd), lambda i, j: (i, j)),
                      pl.BlockSpec((1, bd), lambda i, j: (0, j)),
                      pl.BlockSpec((bn, 1), lambda i, j: (i, 0))],
            out_specs=pl.BlockSpec((bn, bd), lambda i, j: (i, j)),
        ),
        input_output_aliases={0: 0},     # out reuses x2's HBM buffer (x dead after)
        compiler_params=pltpu.CompilerParams(
            dimension_semantics=("parallel", "parallel"),
            vmem_limit_bytes=_vmem_limit_bytes()),
        cost_estimate=pl.CostEstimate(flops=2 * N * D, transcendentals=0,
                                      bytes_accessed=bytes_accessed),
    )(x2, gate, slice_gate)


# --------------------------------------------------------------------------- #
# Full CSAM forward (gate math on pooled vectors runs in the JAX wrapper --
# O(C*HW + N) work, negligible next to the streamed HBM passes).
# --------------------------------------------------------------------------- #
def csam_forward(x, params, noise_key, rank=RANK):
    N, C, H, W = x.shape
    HW = H * W
    D = C * HW
    small = (x.size * x.dtype.itemsize) <= _SMALL_INPUT_BYTES

    # ---- Pass A: per-(channel, pixel) stats over slices (1 read of x) --------
    x3 = x.reshape(N, C, HW)
    if small:                       # launch-overhead bound -> fused jnp stats
        xf3 = x3.astype(jnp.float32)
        max_nc = jnp.max(xf3, axis=0)
        sum_nc = jnp.sum(xf3, axis=0)
    else:
        max_nc, sum_nc = nc_stats(x3)

    # ---- Semantic (channel) gate: shared 2-layer MLP, max & mean batched -----
    ch_max = jnp.max(max_nc, axis=1)                       # max over (N, H, W)
    ch_mean = jnp.sum(sum_nc, axis=1) / float(N * HW)      # mean over (N, H, W)
    st = jnp.stack([ch_max, ch_mean], axis=0)              # (2, C)
    h = jax.nn.relu(st @ params["sem_w1"].T + params["sem_b1"])
    mlp = h @ params["sem_w2"].T + params["sem_b2"]        # (2, C)
    a_c = jax.nn.sigmoid(mlp[0] + mlp[1])                  # (C,)

    # ---- Positional gate: stats of (x * a_c) folded from pass A (a_c > 0) ----
    pos_max = jnp.max(a_c[:, None] * max_nc, axis=0)               # (HW,)
    pos_avg = jnp.sum(a_c[:, None] * sum_nc, axis=0) / float(N * C)
    att_in = jnp.stack([pos_max, pos_avg], axis=0).reshape(1, 2, H, W)
    conv = jax.lax.conv_general_dilated(
        att_in, params["conv_w"], window_strides=(1, 1),
        padding=((3, 3), (3, 3)),
        dimension_numbers=("NCHW", "OIHW", "NCHW"))
    p_hw = jax.nn.sigmoid(conv[0, 0] + params["conv_b"][0])        # (H, W)

    # Combined per-element gate, identical for every slice (kept in f32).
    gate = (a_c[:, None] * p_hw.reshape(1, HW)).reshape(1, D)      # (1, D) f32

    # ---- Pass B: per-slice stats of x * gate (1 read of x) -------------------
    x2 = x.reshape(N, D)
    if small:
        y = x2.astype(jnp.float32) * gate
        sl_max = jnp.max(y, axis=1)
        sl_mean = jnp.mean(y, axis=1)
    else:
        mx, sm = slice_stats(x2, gate)
        sl_max = mx[:, 0]
        sl_mean = sm[:, 0] / float(D)

    # ---- Slice gate: MLP + low-rank Gaussian reparameterised sample ----------
    st = jnp.stack([sl_max, sl_mean], axis=0)              # (2, N)
    h = jax.nn.relu(st @ params["sl_w1"].T + params["sl_b1"])
    mlp = h @ params["sl_w2"].T + params["sl_b2"]          # (2, N)
    att = mlp[0] + mlp[1]                                  # (N,)
    temp = jax.nn.relu(att)
    mean = temp @ params["mean_w"].T + params["mean_b"]
    diag = jnp.exp(temp @ params["diag_w"].T + params["diag_b"])
    factor = (temp @ params["fac_w"].T + params["fac_b"]).reshape(N, rank)
    k1, k2 = jax.random.split(noise_key)
    eps_w = jax.random.normal(k1, (rank,), jnp.float32)    # ~ N(0, I_rank)
    eps_d = jax.random.normal(k2, (N,), jnp.float32)       # ~ N(0, I_N)
    z = mean + factor @ eps_w + jnp.sqrt(diag) * eps_d     # LowRankMVN rsample
    s_n = jax.nn.sigmoid(z).reshape(N, 1)

    # ---- Pass C: 1 read + 1 write of x, in the input's native dtype ----------
    out2 = apply_gates(x2, gate, s_n)
    return out2.reshape(N, C, H, W)


# --------------------------------------------------------------------------- #
# Pure-JAX reference (mirrors the PyTorch module literally) for verification
# --------------------------------------------------------------------------- #
def csam_reference(x, params, noise_key, rank=RANK):
    N, C, H, W = x.shape
    x = x.astype(jnp.float32)

    def sem_mlp(v):
        hh = jax.nn.relu(v @ params["sem_w1"].T + params["sem_b1"])
        return hh @ params["sem_w2"].T + params["sem_b2"]

    a_c = jax.nn.sigmoid(sem_mlp(jnp.max(x, axis=(0, 2, 3)))
                         + sem_mlp(jnp.mean(x, axis=(0, 2, 3))))
    x = x * a_c[None, :, None, None]

    att_in = jnp.stack([jnp.max(x, axis=(0, 1)), jnp.mean(x, axis=(0, 1))],
                       axis=0)[None]                       # (1, 2, H, W)
    conv = jax.lax.conv_general_dilated(
        att_in, params["conv_w"], (1, 1), ((3, 3), (3, 3)),
        dimension_numbers=("NCHW", "OIHW", "NCHW"))
    p_hw = jax.nn.sigmoid(conv[0, 0] + params["conv_b"][0])
    x = x * p_hw[None, None, :, :]

    def sl_mlp(v):
        hh = jax.nn.relu(v @ params["sl_w1"].T + params["sl_b1"])
        return hh @ params["sl_w2"].T + params["sl_b2"]

    att = sl_mlp(jnp.max(x, axis=(1, 2, 3))) + sl_mlp(jnp.mean(x, axis=(1, 2, 3)))
    temp = jax.nn.relu(att)
    mean = temp @ params["mean_w"].T + params["mean_b"]
    diag = jnp.exp(temp @ params["diag_w"].T + params["diag_b"])
    factor = (temp @ params["fac_w"].T + params["fac_b"]).reshape(N, rank)
    k1, k2 = jax.random.split(noise_key)
    eps_w = jax.random.normal(k1, (rank,), jnp.float32)
    eps_d = jax.random.normal(k2, (N,), jnp.float32)
    z = mean + factor @ eps_w + jnp.sqrt(diag) * eps_d
    s_n = jax.nn.sigmoid(z)
    return x * s_n[:, None, None, None]


# --------------------------------------------------------------------------- #
# Parameter init (deterministic, PyTorch-style uniform bounds)
# --------------------------------------------------------------------------- #
def _linear_params(key, fan_in, fan_out):
    kw, kb = jax.random.split(key)
    bound = 1.0 / math.sqrt(fan_in)
    w = jax.random.uniform(kw, (fan_out, fan_in), jnp.float32, -bound, bound)
    b = jax.random.uniform(kb, (fan_out,), jnp.float32, -bound, bound)
    return w, b


def init_csam_params(key, num_slices, num_channels, rank=RANK,
                     reduction_rate=16, rate=4):
    keys = jax.random.split(key, 8)
    C, N = num_channels, num_slices
    hid_c = C // reduction_rate
    hid_s = int(N * rate)
    p = {}
    p["sem_w1"], p["sem_b1"] = _linear_params(keys[0], C, hid_c)
    p["sem_w2"], p["sem_b2"] = _linear_params(keys[1], hid_c, C)
    kcw, kcb = jax.random.split(keys[2])
    cbound = 1.0 / math.sqrt(2 * 7 * 7)
    p["conv_w"] = jax.random.uniform(kcw, (1, 2, 7, 7), jnp.float32, -cbound, cbound)
    p["conv_b"] = jax.random.uniform(kcb, (1,), jnp.float32, -cbound, cbound)
    p["sl_w1"], p["sl_b1"] = _linear_params(keys[3], N, hid_s)
    p["sl_w2"], p["sl_b2"] = _linear_params(keys[4], hid_s, N)
    p["mean_w"], p["mean_b"] = _linear_params(keys[5], N, N)
    p["diag_w"], p["diag_b"] = _linear_params(keys[6], N, N)
    p["fac_w"], p["fac_b"] = _linear_params(keys[7], N, N * rank)
    return p


if __name__ == "__main__":
    key = jax.random.PRNGKey(0)
    kx, kp, ke = jax.random.split(key, 3)

    fwd = jax.jit(csam_forward)

    # --- Test 1: small activation (fast-path pooled stats + Pallas apply) ----
    N, C, H, W = 8, 32, 16, 16           # num_slices=8, num_channels=32
    params = init_csam_params(kp, num_slices=N, num_channels=C)
    x = jax.random.normal(kx, (N, C, H, W), jnp.float32)
    out = fwd(x, params, ke)
    jax.block_until_ready(out)
    assert out.shape == (N, C, H, W) and out.dtype == jnp.float32
    assert bool(jnp.all(jnp.isfinite(out)))
    ref = csam_reference(x, params, ke)
    assert bool(jnp.allclose(out, ref, rtol=1e-3, atol=1e-4)), "mismatch (small f32)"

    # --- Test 2: larger activation, full 3-pass Pallas streaming path (f32) ---
    H2, W2 = 32, 32
    x_big = jax.random.normal(kx, (N, C, H2, W2), jnp.float32)
    out_big = fwd(x_big, params, ke)
    jax.block_until_ready(out_big)
    ref_big = csam_reference(x_big, params, ke)
    assert bool(jnp.allclose(out_big, ref_big, rtol=1e-3, atol=1e-4)), \
        "mismatch (large f32)"

    # --- Test 3: native bf16 streaming through all three Pallas passes --------
    x_bf16 = x_big.astype(jnp.bfloat16)
    out_bf16 = fwd(x_bf16, params, ke)
    jax.block_until_ready(out_bf16)
    assert out_bf16.dtype == jnp.bfloat16 and out_bf16.shape == x_bf16.shape
    assert bool(jnp.all(jnp.isfinite(out_bf16.astype(jnp.float32))))
    ref_bf16 = csam_reference(x_bf16, params, ke)     # f32 math on bf16 inputs
    assert bool(jnp.allclose(out_bf16.astype(jnp.float32), ref_bf16,
                             rtol=5e-2, atol=5e-2)), "mismatch (bf16)"

    print("KERNEL_OK")
</pallas_src>

<mosaic_0001>
module attributes {stable_mosaic.version = 11 : i64} {
  func.func @_apply_kernel(%arg0: i32, %arg1: i32, %arg2: memref<8x4096xf32, #tpu.memory_space<vmem>>, %arg3: memref<1x4096xf32, #tpu.memory_space<vmem>>, %arg4: memref<8x1xf32, #tpu.memory_space<vmem>>, %arg5: memref<8x4096xf32, #tpu.memory_space<vmem>>) attributes {dimension_semantics = [#tpu.dimension_semantics<parallel>, #tpu.dimension_semantics<parallel>], iteration_bounds = array<i64: 1, 2>, scalar_prefetch = 0 : i64, scratch_operands = 0 : i64, tpu.core_type = #tpu.core_type<tc>, window_params = [{transform_indices = @transform_0, window_bounds = array<i64: 8, 4096>}, {transform_indices = @transform_1, window_bounds = array<i64: 1, 4096>}, {transform_indices = @transform_2, window_bounds = array<i64: 8, 1>}, {transform_indices = @transform_3, window_bounds = array<i64: 8, 4096>}]} {
    %c0 = arith.constant 0 : index
    %c0_0 = arith.constant 0 : index
    %0 = vector.load %arg2[%c0, %c0_0] : memref<8x4096xf32, #tpu.memory_space<vmem>>, vector<8x4096xf32>
    %c0_1 = arith.constant 0 : index
    %c0_2 = arith.constant 0 : index
    %1 = vector.load %arg3[%c0_1, %c0_2] : memref<1x4096xf32, #tpu.memory_space<vmem>>, vector<1x4096xf32>
    %2 = vector.broadcast %1 : vector<1x4096xf32> to vector<8x4096xf32>
    %3 = arith.mulf %0, %2 : vector<8x4096xf32>
    %c0_3 = arith.constant 0 : index
    %c0_4 = arith.constant 0 : index
    %4 = vector.load %arg4[%c0_3, %c0_4] : memref<8x1xf32, #tpu.memory_space<vmem>>, vector<8x1xf32>
    %5 = vector.broadcast %4 : vector<8x1xf32> to vector<8x4096xf32>
    %6 = arith.mulf %3, %5 : vector<8x4096xf32>
    %c0_5 = arith.constant 0 : index
    %c0_6 = arith.constant 0 : index
    %7 = vector.load %arg5[%c0_5, %c0_6] : memref<8x4096xf32, #tpu.memory_space<vmem>>, vector<8x4096xf32>
    tpu.vector_store %arg5[%c0_5, %c0_6], %6 {strides = array<i32>} : memref<8x4096xf32, #tpu.memory_space<vmem>>, vector<8x4096xf32>,
    return
  }
  func.func @transform_0(%arg0: i32, %arg1: i32) -> (i32, i32) {
    %c0_i32 = arith.constant 0 : i32
    return %arg0, %arg1 : i32, i32
  }
  func.func @transform_1(%arg0: i32, %arg1: i32) -> (i32, i32) {
    %c0_i32 = arith.constant 0 : i32
    %c0_i32_0 = arith.constant 0 : i32
    return %c0_i32, %arg1 : i32, i32
  }
  func.func @transform_2(%arg0: i32, %arg1: i32) -> (i32, i32) {
    %c0_i32 = arith.constant 0 : i32
    %c0_i32_0 = arith.constant 0 : i32
    return %arg0, %c0_i32 : i32, i32
  }
  func.func @transform_3(%arg0: i32, %arg1: i32) -> (i32, i32) {
    %c0_i32 = arith.constant 0 : i32
    return %arg0, %arg1 : i32, i32
  }
}

</mosaic_0001>

<llo_original>
// kernel: csam_forward.3
$region0: #{csam_forward.3}
  #allocation0 [shape = 'u32[]', space=smem, size = 0x4, offset = 0x4, fixed_abs, tag = 'smem constant byte address 0x4 - core index']
  #allocation1 [shape = 'u32[144,128]{1,0:T(1,128)}', space=vmem, size = 0x12000, scoped, tag = 'internal scratch']
  %s0 = inlined_call_operand.vmem [shape: f32[8,8192], index: 0, kind: input, shape index: {}, may-alias: {0,3}]
  %s1 = inlined_call_operand.vmem [shape: f32[1,8192], index: 1, kind: input, shape index: {}]
  %s2 = inlined_call_operand.vmem [shape: f32[8,1], index: 2, kind: input, shape index: {}]
  %s3 = inlined_call_operand.vmem [shape: f32[8,8192], index: 3, kind: output, shape index: {}, may-alias: {0,3}]
  %s4 = sld [smem:[#allocation0]]
  $region45: #{csam_forward.3} parent=0
    _
  %s6 = ssub.s32 1, %s4
  %s7 = scalar_select 0, %s6, %s4
  loop: start=0, step=1, limit=4
  $region2: #{csam_forward.3} parent=0 // loop_pre_header
    _
  $region3: #{csam_forward.3} parent=0 // loop_header
    %s9 = sphi 0, %s13
    %p10 = scmp.ge.s32.totalorder %s9, 4
    %s16 = sphi 0, %s28
    %s17 = sphi 0, %s24
    %s18 = sphi 0, %s16
    %s19 = sphi 0, %s17
    %s20 = sphi 0, %s18
    %s21 = sphi 0, %s19
    %s33 = sphi 0, %s35
    %s36 = sphi 0, %s33
    %s37 = sphi 0, %s36
    %s53 = sphi 0, %s37
    %s59 = sphi 0, %s61
    %s62 = sphi 0, %s59
    %s63 = sphi 0, %s62
    %s79 = sphi 0, %s63
    %s85 = sphi 0, %s87
    %s88 = sphi 0, %s85
    %s89 = sphi 0, %s88
    %s105 = sphi 0, %s89
    %s113 = sphi 0, %s115
    %s116 = sphi 0, %s113
    %s117 = sphi 0, %s116
    %s133 = sphi 0, %s117
  $region4: #{csam_forward.3} parent=0 // loop_header_branch
    %12 = sbr.rel (%p10) target = $region8
  $region5: #{csam_forward.3} parent=0 // loop_body
    %s14 = ssub.s32 %s9, 1
    %s15 = ssub.s32 %s9, 2
    %s22 = sadd.s32 1, %s17
    %p23 = scmp.ge.s32.totalorder %s22, 2
    %s24 = scalar_select %p23, 0, %s22
    %s25 = sadd.s32 1, %s16
    %s26 = scalar_select %p23, %s25, %s16
    %p27 = scmp.ge.s32.totalorder %s26, 1
    %s28 = scalar_select %p27, 0, %s26
    %s29 = ssub.s32 %s16, %s28
    %s30 = ssub.s32 %s17, %s24
    %s31 = sor.u32 %s29, %s30
    %p32 = scmp.eq.s32.totalorder %s31, 0
    %s34 = sadd.s32 %s33, 1
    %s35 = scalar_select %p32, %s33, %s34
    %p38 = pneg %p32
    %p39 = scmp.eq.s32.totalorder %s9, 1
    %p40 = por %p38, %p39
    %p41 = scmp.ne.s32.totalorder %s33, %s36
    %p42 = scmp.eq.s32.totalorder %s9, 0
    %p43 = por %p41, %p42
    %p44 = scmp.ne.s32.totalorder %s33, %s36
    %p45 = scmp.eq.s32.totalorder %s14, 1
    %p46 = por %p44, %p45
    %p47 = scmp.ne.s32.totalorder %s36, %s37
    %p48 = scmp.eq.s32.totalorder %s14, 0
    %p49 = por %p47, %p48
    %p50 = scmp.ne.s32.totalorder %s36, %s37
    %p51 = scmp.eq.s32.totalorder %s15, 1
    %p52 = por %p50, %p51
    %p54 = scmp.ne.s32.totalorder %s37, %s53
    %p55 = scmp.eq.s32.totalorder %s15, 0
    %p56 = por %p54, %p55
    %s57 = ssub.s32 %s17, %s24
    %p58 = scmp.eq.s32.totalorder %s57, 0
    %s60 = sadd.s32 %s59, 1
    %s61 = scalar_select %p58, %s59, %s60
    %p64 = pneg %p58
    %p65 = scmp.eq.s32.totalorder %s9, 1
    %p66 = por %p64, %p65
    %p67 = scmp.ne.s32.totalorder %s59, %s62
    %p68 = scmp.eq.s32.totalorder %s9, 0
    %p69 = por %p67, %p68
    %p70 = scmp.ne.s32.totalorder %s59, %s62
    %p71 = scmp.eq.s32.totalorder %s14, 1
    %p72 = por %p70, %p71
    %p73 = scmp.ne.s32.totalorder %s62, %s63
    %p74 = scmp.eq.s32.totalorder %s14, 0
    %p75 = por %p73, %p74
    %p76 = scmp.ne.s32.totalorder %s62, %s63
    %p77 = scmp.eq.s32.totalorder %s15, 1
    %p78 = por %p76, %p77
    %p80 = scmp.ne.s32.totalorder %s63, %s79
    %p81 = scmp.eq.s32.totalorder %s15, 0
    %p82 = por %p80, %p81
    %s83 = ssub.s32 %s16, %s28
    %p84 = scmp.eq.s32.totalorder %s83, 0
    %s86 = sadd.s32 %s85, 1
    %s87 = scalar_select %p84, %s85, %s86
    %p90 = pneg %p84
    %p91 = scmp.eq.s32.totalorder %s9, 1
    %p92 = por %p90, %p91
    %p93 = scmp.ne.s32.totalorder %s85, %s88
    %p94 = scmp.eq.s32.totalorder %s9, 0
    %p95 = por %p93, %p94
    %p96 = scmp.ne.s32.totalorder %s85, %s88
    %p97 = scmp.eq.s32.totalorder %s14, 1
    %p98 = por %p96, %p97
    %p99 = scmp.ne.s32.totalorder %s88, %s89
    %p100 = scmp.eq.s32.totalorder %s14, 0
    %p101 = por %p99, %p100
    %p102 = scmp.ne.s32.totalorder %s88, %s89
    %p103 = scmp.eq.s32.totalorder %s15, 1
    %p104 = por %p102, %p103
    %p106 = scmp.ne.s32.totalorder %s89, %s105
    %p107 = scmp.eq.s32.totalorder %s15, 0
    %p108 = por %p106, %p107
    %s109 = ssub.s32 %s16, %s28
    %s110 = ssub.s32 %s17, %s24
    %s111 = sor.u32 %s109, %s110
    %p112 = scmp.eq.s32.totalorder %s111, 0
    %s114 = sadd.s32 %s113, 1
    %s115 = scalar_select %p112, %s113, %s114
    %p118 = pneg %p112
    %p119 = scmp.eq.s32.totalorder %s9, 1
    %p120 = por %p118, %p119
    %p121 = scmp.ne.s32.totalorder %s113, %s116
    %p122 = scmp.eq.s32.totalorder %s9, 0
    %p123 = por %p121, %p122
    %p124 = scmp.ne.s32.totalorder %s113, %s116
    %p125 = scmp.eq.s32.totalorder %s14, 1
    %p126 = por %p124, %p125
    %p127 = scmp.ne.s32.totalorder %s116, %s117
    %p128 = scmp.eq.s32.totalorder %s14, 0
    %p129 = por %p127, %p128
    %p130 = scmp.ne.s32.totalorder %s116, %s117
    %p131 = scmp.eq.s32.totalorder %s15, 1
    %p132 = por %p130, %p131
    %p134 = scmp.ne.s32.totalorder %s117, %s133
    %p135 = scmp.eq.s32.totalorder %s15, 0
    %p136 = por %p134, %p135
    %p137 = scmp.le.s32.totalorder 1, %s9
    %p138 = scmp.lt.s32.totalorder %s9, 3
    %p139 = pnand %p137, %p138
    %p140 = pneg %p139
    // Predicated region
    $region9: #{csam_forward.3} parent=5 // pred_check
      _
    $region10: #{csam_forward.3} parent=5 // pred_check_branch
      %142 = sbr.rel (%p139) target = $region12
    $region11: #{csam_forward.3} parent=5 // pred_region
      %s143 = ssub.s32 %s9, 1
      // Predicated region
      $region13: #{csam_forward.3} parent=11 // pred_check
        %p144 = pneg %p101
      $region14: #{csam_forward.3} parent=11 // pred_check_branch
        %146 = sbr.rel (%p144) target = $region16
      $region15: #{csam_forward.3} parent=11 // pred_region
        %p147 = scmp.lt.s32.totalorder %s18, 0
        %s148 = scalar_select %p147, %s18, 0
        %s149 = smul.addr %s148, 8
        %s150 = scalar_lea.vmem %s2, %s149
      $region16: #{csam_forward.3} parent=11 // pred_fallthru
        _
    $region12: #{csam_forward.3} parent=5 // pred_fallthru
      _
    %p151 = scmp.lt.s32.totalorder %s9, 2
    // Predicated region
    $region17: #{csam_forward.3} parent=5 // pred_check
      %p152 = pneg %p151
    $region18: #{csam_forward.3} parent=5 // pred_check_branch
      %154 = sbr.rel (%p152) target = $region20
    $region19: #{csam_forward.3} parent=5 // pred_region
      // Predicated region
      $region21: #{csam_forward.3} parent=19 // pred_check
        %p155 = pneg %p43
      $region22: #{csam_forward.3} parent=19 // pred_check_branch
        %157 = sbr.rel (%p155) target = $region24
      $region23: #{csam_forward.3} parent=19 // pred_region
        %s158 = smul.u32 32, %s17
        %p159 = scmp.lt.s32.totalorder %s16, 0
        %s160 = scalar_select %p159, %s16, 0
        %p161 = scmp.lt.s32.totalorder %s158, 63
        %s162 = scalar_select %p161, %s158, 63
        %s163 = smul.addr %s160, 64
        %s164 = sadd.s32 %s162, %s163
        %s165 = smul.addr %s164, 8
        %s166 = scalar_lea.vmem %s0, %s165
        %s167 = smul.u32 32, %s17
      $region24: #{csam_forward.3} parent=19 // pred_fallthru
        _
      // Predicated region
      $region25: #{csam_forward.3} parent=19 // pred_check
        %p168 = pneg %p69
      $region26: #{csam_forward.3} parent=19 // pred_check_branch
        %170 = sbr.rel (%p168) target = $region28
      $region27: #{csam_forward.3} parent=19 // pred_region
        %s171 = smul.u32 32, %s17
        %p172 = scmp.lt.s32.totalorder %s171, 63
        %s173 = scalar_select %p172, %s171, 63
        %s174 = scalar_lea.vmem %s1, %s173
        %s175 = smul.u32 32, %s17
      $region28: #{csam_forward.3} parent=19 // pred_fallthru
        _
    $region20: #{csam_forward.3} parent=5 // pred_fallthru
      _
    %p176 = scmp.le.s32.totalorder 1, %s9
    %p177 = scmp.lt.s32.totalorder %s9, 3
    %p178 = pnand %p176, %p177
    %p179 = pneg %p178
    // Predicated region
    $region29: #{csam_forward.3} parent=5 // pred_check
      _
    $region30: #{csam_forward.3} parent=5 // pred_check_branch
      %181 = sbr.rel (%p178) target = $region32
    $region31: #{csam_forward.3} parent=5 // pred_region
      %s182 = ssub.s32 %s9, 1
      %s183 = smul.u32 32, %s19
      %p184 = scmp.lt.s32.totalorder %s18, 0
      %s185 = scalar_select %p184, %s18, 0
      %p186 = scmp.lt.s32.totalorder %s183, 63
      %s187 = scalar_select %p186, %s183, 63
      %s188 = smul.addr %s185, 64
      %s189 = sadd.s32 %s187, %s188
      %s190 = smul.addr %s189, 8
      %s191 = scalar_lea.vmem %s0, %s190
      %p192 = pneg %p49
      %p193 = pneg %p46
      %s194 = smul.u32 32, %s19
      %p195 = scmp.lt.s32.totalorder %s194, 63
      %s196 = scalar_select %p195, %s194, 63
      %s197 = scalar_lea.vmem %s1, %s196
      %p198 = pneg %p75
      %p199 = pneg %p72
      %p200 = scmp.lt.s32.totalorder %s18, 0
      %s201 = scalar_select %p200, %s18, 0
      %s202 = smul.addr %s201, 8
      %s203 = scalar_lea.vmem %s2, %s202
      %p204 = pneg %p101
      %p205 = pneg %p98
      %p206 = pneg %p129
      %p207 = pneg %p126
      %s208 = smul.u32 32, %s19
      %p209 = scmp.lt.s32.totalorder %s18, 0
      %s210 = scalar_select %p209, %s18, 0
      %p211 = scmp.lt.s32.totalorder %s208, 63
      %s212 = scalar_select %p211, %s208, 63
      %s213 = smul.addr %s210, 64
      %s214 = sadd.s32 %s212, %s213
      %s215 = smul.addr %s214, 8
      %s216 = scalar_lea.vmem %s3, %s215
      %s217 = smul.u32 32, %s19
      %p218 = scmp.lt.s32.totalorder %s18, 0
      %s219 = scalar_select %p218, %s18, 0
      %p220 = scmp.lt.s32.totalorder %s217, 63
      %s221 = scalar_select %p220, %s217, 63
      %s222 = smul.addr %s219, 64
      %s223 = sadd.s32 %s221, %s222
      %s224 = smul.addr %s223, 8
      %s225 = scalar_lea.vmem %s0, %s224
      %s226 = smul.u32 32, %s19
      %s227 = smul.u32 32, %s19
      %p228 = scmp.lt.s32.totalorder %s227, 63
      %s229 = scalar_select %p228, %s227, 63
      %s230 = scalar_lea.vmem %s1, %s229
      %s231 = smul.u32 32, %s19
      %p232 = scmp.lt.s32.totalorder %s18, 0
      %s233 = scalar_select %p232, %s18, 0
      %s234 = smul.addr %s233, 8
      %s235 = scalar_lea.vmem %s2, %s234
      %s236 = smul.u32 32, %s19
      %p237 = scmp.lt.s32.totalorder %s18, 0
      %s238 = scalar_select %p237, %s18, 0
      %p239 = scmp.lt.s32.totalorder %s236, 63
      %s240 = scalar_select %p239, %s236, 63
      %s241 = smul.addr %s238, 64
      %s242 = sadd.s32 %s240, %s241
      %s243 = smul.addr %s242, 8
      %s244 = scalar_lea.vmem %s3, %s243
      %s245 = smul.u32 32, %s19
      %v246 = vld [vmem:[%s225] sm:$0xff]
      %v247 = vld [vmem:[%s225 + $0x8] sm:$0xff]
      %v248 = vld [vmem:[%s225 + $0x10] sm:$0xff]
      %v249 = vld [vmem:[%s225 + $0x18] sm:$0xff]
      %v250 = vld [vmem:[%s225 + $0x20] sm:$0xff]
      %v251 = vld [vmem:[%s225 + $0x28] sm:$0xff]
      %v252 = vld [vmem:[%s225 + $0x30] sm:$0xff]
      %v253 = vld [vmem:[%s225 + $0x38] sm:$0xff]
      %v254 = vld [vmem:[%s225 + $0x40] sm:$0xff]
      %v255 = vld [vmem:[%s225 + $0x48] sm:$0xff]
      %v256 = vld [vmem:[%s225 + $0x50] sm:$0xff]
      %v257 = vld [vmem:[%s225 + $0x58] sm:$0xff]
      %v258 = vld [vmem:[%s225 + $0x60] sm:$0xff]
      %v259 = vld [vmem:[%s225 + $0x68] sm:$0xff]
      %v260 = vld [vmem:[%s225 + $0x70] sm:$0xff]
      %v261 = vld [vmem:[%s225 + $0x78] sm:$0xff]
      %v262 = vld [vmem:[%s225 + $0x80] sm:$0xff]
      %v263 = vld [vmem:[%s225 + $0x88] sm:$0xff]
      %v264 = vld [vmem:[%s225 + $0x90] sm:$0xff]
      %v265 = vld [vmem:[%s225 + $0x98] sm:$0xff]
      %v266 = vld [vmem:[%s225 + $0xa0] sm:$0xff]
      %v267 = vld [vmem:[%s225 + $0xa8] sm:$0xff]
      %v268 = vld [vmem:[%s225 + $0xb0] sm:$0xff]
      %v269 = vld [vmem:[%s225 + $0xb8] sm:$0xff]
      %v270 = vld [vmem:[%s225 + $0xc0] sm:$0xff]
      %v271 = vld [vmem:[%s225 + $0xc8] sm:$0xff]
      %v272 = vld [vmem:[%s225 + $0xd0] sm:$0xff]
      %v273 = vld [vmem:[%s225 + $0xd8] sm:$0xff]
      %v274 = vld [vmem:[%s225 + $0xe0] sm:$0xff]
      %v275 = vld [vmem:[%s225 + $0xe8] sm:$0xff]
      %v276 = vld [vmem:[%s225 + $0xf0] sm:$0xff]
      %v277 = vld [vmem:[%s225 + $0xf8] sm:$0xff]
      %v278 = vld [vmem:[%s230] sm:$0xff]
      %v279 = vld [vmem:[%s230 + $0x8] sm:$0xff]
      %v280 = vld [vmem:[%s230 + $0x10] sm:$0xff]
      %v281 = vld [vmem:[%s230 + $0x18] sm:$0xff]
      %v286 = vlaneseq
      %v287 = vshrl.u32 %v286, 7
      %v288 = vsub.s32 0, %v287
      %v289 = vrot.slane %v278, %v288
      %v290 = vlaneseq
      %v291 = vshrl.u32 %v290, 7
      %v292 = vsub.s32 1, %v291
      %v293 = vrot.slane %v278, %v292
      %v294 = vlaneseq
      %v295 = vshrl.u32 %v294, 7
      %v296 = vsub.s32 2, %v295
      %v297 = vrot.slane %v278, %v296
      %v298 = vlaneseq
      %v299 = vshrl.u32 %v298, 7
      %v300 = vsub.s32 3, %v299
      %v301 = vrot.slane %v278, %v300
      %v302 = vlaneseq
      %v303 = vshrl.u32 %v302, 7
      %v304 = vsub.s32 4, %v303
      %v305 = vrot.slane %v278, %v304
      %v306 = vlaneseq
      %v307 = vshrl.u32 %v306, 7
      %v308 = vsub.s32 5, %v307
      %v309 = vrot.slane %v278, %v308
      %v310 = vlaneseq
      %v311 = vshrl.u32 %v310, 7
      %v312 = vsub.s32 6, %v311
      %v313 = vrot.slane %v278, %v312
      %v314 = vlaneseq
      %v315 = vshrl.u32 %v314, 7
      %v316 = vsub.s32 7, %v315
      %v317 = vrot.slane %v278, %v316
      %v318 = vlaneseq
      %v319 = vshrl.u32 %v318, 7
      %v320 = vsub.s32 0, %v319
      %v321 = vrot.slane %v279, %v320
      %v322 = vlaneseq
      %v323 = vshrl.u32 %v322, 7
      %v324 = vsub.s32 1, %v323
      %v325 = vrot.slane %v279, %v324
      %v326 = vlaneseq
      %v327 = vshrl.u32 %v326, 7
      %v328 = vsub.s32 2, %v327
      %v329 = vrot.slane %v279, %v328
      %v330 = vlaneseq
      %v331 = vshrl.u32 %v330, 7
      %v332 = vsub.s32 3, %v331
      %v333 = vrot.slane %v279, %v332
      %v334 = vlaneseq
      %v335 = vshrl.u32 %v334, 7
      %v336 = vsub.s32 4, %v335
      %v337 = vrot.slane %v279, %v336
      %v338 = vlaneseq
      %v339 = vshrl.u32 %v338, 7
      %v340 = vsub.s32 5, %v339
      %v341 = vrot.slane %v279, %v340
      %v342 = vlaneseq
      %v343 = vshrl.u32 %v342, 7
      %v344 = vsub.s32 6, %v343
      %v345 = vrot.slane %v279, %v344
      %v346 = vlaneseq
      %v347 = vshrl.u32 %v346, 7
      %v348 = vsub.s32 7, %v347
      %v349 = vrot.slane %v279, %v348
      %v350 = vlaneseq
      %v351 = vshrl.u32 %v350, 7
      %v352 = vsub.s32 0, %v351
      %v353 = vrot.slane %v280, %v352
      %v354 = vlaneseq
      %v355 = vshrl.u32 %v354, 7
      %v356 = vsub.s32 1, %v355
      %v357 = vrot.slane %v280, %v356
      %v358 = vlaneseq
      %v359 = vshrl.u32 %v358, 7
      %v360 = vsub.s32 2, %v359
      %v361 = vrot.slane %v280, %v360
      %v362 = vlaneseq
      %v363 = vshrl.u32 %v362, 7
      %v364 = vsub.s32 3, %v363
      %v365 = vrot.slane %v280, %v364
      %v366 = vlaneseq
      %v367 = vshrl.u32 %v366, 7
      %v368 = vsub.s32 4, %v367
      %v369 = vrot.slane %v280, %v368
      %v370 = vlaneseq
      %v371 = vshrl.u32 %v370, 7
      %v372 = vsub.s32 5, %v371
      %v373 = vrot.slane %v280, %v372
      %v374 = vlaneseq
      %v375 = vshrl.u32 %v374, 7
      %v376 = vsub.s32 6, %v375
      %v377 = vrot.slane %v280, %v376
      %v378 = vlaneseq
      %v379 = vshrl.u32 %v378, 7
      %v380 = vsub.s32 7, %v379
      %v381 = vrot.slane %v280, %v380
      %v382 = vlaneseq
      %v383 = vshrl.u32 %v382, 7
      %v384 = vsub.s32 0, %v383
      %v385 = vrot.slane %v281, %v384
      %v386 = vlaneseq
      %v387 = vshrl.u32 %v386, 7
      %v388 = vsub.s32 1, %v387
      %v389 = vrot.slane %v281, %v388
      %v390 = vlaneseq
      %v391 = vshrl.u32 %v390, 7
      %v392 = vsub.s32 2, %v391
      %v393 = vrot.slane %v281, %v392
      %v394 = vlaneseq
      %v395 = vshrl.u32 %v394, 7
      %v396 = vsub.s32 3, %v395
      %v397 = vrot.slane %v281, %v396
      %v398 = vlaneseq
      %v399 = vshrl.u32 %v398, 7
      %v400 = vsub.s32 4, %v399
      %v401 = vrot.slane %v281, %v400
      %v402 = vlaneseq
      %v403 = vshrl.u32 %v402, 7
      %v404 = vsub.s32 5, %v403
      %v405 = vrot.slane %v281, %v404
      %v406 = vlaneseq
      %v407 = vshrl.u32 %v406, 7
      %v408 = vsub.s32 6, %v407
      %v409 = vrot.slane %v281, %v408
      %v410 = vlaneseq
      %v411 = vshrl.u32 %v410, 7
      %v412 = vsub.s32 7, %v411
      %v413 = vrot.slane %v281, %v412
      %v446 = vmul.f32 %v246, %v289
      %v447 = vmul.f32 %v247, %v293
      %v448 = vmul.f32 %v248, %v297
      %v449 = vmul.f32 %v249, %v301
      %v450 = vmul.f32 %v250, %v305
      %v451 = vmul.f32 %v251, %v309
      %v452 = vmul.f32 %v252, %v313
      %v453 = vmul.f32 %v253, %v317
      %v454 = vmul.f32 %v254, %v321
      %v455 = vmul.f32 %v255, %v325
      %v456 = vmul.f32 %v256, %v329
      %v457 = vmul.f32 %v257, %v333
      %v458 = vmul.f32 %v258, %v337
      %v459 = vmul.f32 %v259, %v341
      %v460 = vmul.f32 %v260, %v345
      %v461 = vmul.f32 %v261, %v349
      %v462 = vmul.f32 %v262, %v353
      %v463 = vmul.f32 %v263, %v357
      %v464 = vmul.f32 %v264, %v361
      %v465 = vmul.f32 %v265, %v365
      %v466 = vmul.f32 %v266, %v369
      %v467 = vmul.f32 %v267, %v373
      %v468 = vmul.f32 %v268, %v377
      %v469 = vmul.f32 %v269, %v381
      %v470 = vmul.f32 %v270, %v385
      %v471 = vmul.f32 %v271, %v389
      %v472 = vmul.f32 %v272, %v393
      %v473 = vmul.f32 %v273, %v397
      %v474 = vmul.f32 %v274, %v401
      %v475 = vmul.f32 %v275, %v405
      %v476 = vmul.f32 %v276, %v409
      %v477 = vmul.f32 %v277, %v413
      %v478 = vld [vmem:[%s235] sm:$0xff]
      %480 = vset.pattern.permute.xlu0 0
      %481 = vperm.xlu0 %480, %v478
      %v482 = vpop.permute.xlu0 %481
      %v484 = vmul.f32 %v446, %v482
      %v485 = vmul.f32 %v447, %v482
      %v486 = vmul.f32 %v448, %v482
      %v487 = vmul.f32 %v449, %v482
      %v488 = vmul.f32 %v450, %v482
      %v489 = vmul.f32 %v451, %v482
      %v490 = vmul.f32 %v452, %v482
      %v491 = vmul.f32 %v453, %v482
      %v492 = vmul.f32 %v454, %v482
      %v493 = vmul.f32 %v455, %v482
      %v494 = vmul.f32 %v456, %v482
      %v495 = vmul.f32 %v457, %v482
      %v496 = vmul.f32 %v458, %v482
      %v497 = vmul.f32 %v459, %v482
      %v498 = vmul.f32 %v460, %v482
      %v499 = vmul.f32 %v461, %v482
      %v500 = vmul.f32 %v462, %v482
      %v501 = vmul.f32 %v463, %v482
      %v502 = vmul.f32 %v464, %v482
      %v503 = vmul.f32 %v465, %v482
      %v504 = vmul.f32 %v466, %v482
      %v505 = vmul.f32 %v467, %v482
      %v506 = vmul.f32 %v468, %v482
      %v507 = vmul.f32 %v469, %v482
      %v508 = vmul.f32 %v470, %v482
      %v509 = vmul.f32 %v471, %v482
      %v510 = vmul.f32 %v472, %v482
      %v511 = vmul.f32 %v473, %v482
      %v512 = vmul.f32 %v474, %v482
      %v513 = vmul.f32 %v475, %v482
      %v514 = vmul.f32 %v476, %v482
      %v515 = vmul.f32 %v477, %v482
      %516 = vst [vmem:[%s244] sm:$0xff] %v484
      %517 = vst [vmem:[%s244 + $0x8] sm:$0xff] %v485
      %518 = vst [vmem:[%s244 + $0x10] sm:$0xff] %v486
      %519 = vst [vmem:[%s244 + $0x18] sm:$0xff] %v487
      %520 = vst [vmem:[%s244 + $0x20] sm:$0xff] %v488
      %521 = vst [vmem:[%s244 + $0x28] sm:$0xff] %v489
      %522 = vst [vmem:[%s244 + $0x30] sm:$0xff] %v490
      %523 = vst [vmem:[%s244 + $0x38] sm:$0xff] %v491
      %524 = vst [vmem:[%s244 + $0x40] sm:$0xff] %v492
      %525 = vst [vmem:[%s244 + $0x48] sm:$0xff] %v493
      %526 = vst [vmem:[%s244 + $0x50] sm:$0xff] %v494
      %527 = vst [vmem:[%s244 + $0x58] sm:$0xff] %v495
      %528 = vst [vmem:[%s244 + $0x60] sm:$0xff] %v496
      %529 = vst [vmem:[%s244 + $0x68] sm:$0xff] %v497
      %530 = vst [vmem:[%s244 + $0x70] sm:$0xff] %v498
      %531 = vst [vmem:[%s244 + $0x78] sm:$0xff] %v499
      %532 = vst [vmem:[%s244 + $0x80] sm:$0xff] %v500
      %533 = vst [vmem:[%s244 + $0x88] sm:$0xff] %v501
      %534 = vst [vmem:[%s244 + $0x90] sm:$0xff] %v502
      %535 = vst [vmem:[%s244 + $0x98] sm:$0xff] %v503
      %536 = vst [vmem:[%s244 + $0xa0] sm:$0xff] %v504
      %537 = vst [vmem:[%s244 + $0xa8] sm:$0xff] %v505
      %538 = vst [vmem:[%s244 + $0xb0] sm:$0xff] %v506
      %539 = vst [vmem:[%s244 + $0xb8] sm:$0xff] %v507
      %540 = vst [vmem:[%s244 + $0xc0] sm:$0xff] %v508
      %541 = vst [vmem:[%s244 + $0xc8] sm:$0xff] %v509
      %542 = vst [vmem:[%s244 + $0xd0] sm:$0xff] %v510
      %543 = vst [vmem:[%s244 + $0xd8] sm:$0xff] %v511
      %544 = vst [vmem:[%s244 + $0xe0] sm:$0xff] %v512
      %545 = vst [vmem:[%s244 + $0xe8] sm:$0xff] %v513
      %546 = vst [vmem:[%s244 + $0xf0] sm:$0xff] %v514
      %547 = vst [vmem:[%s244 + $0xf8] sm:$0xff] %v515
      %s548 = smul.u32 32, %s19
      %p549 = scmp.lt.s32.totalorder %s18, 0
      %s550 = scalar_select %p549, %s18, 0
      %p551 = scmp.lt.s32.totalorder %s548, 63
      %s552 = scalar_select %p551, %s548, 63
      %s553 = smul.addr %s550, 64
      %s554 = sadd.s32 %s552, %s553
      %s555 = smul.addr %s554, 8
      %s556 = scalar_lea.vmem %s3, %s555
      // Predicated region
      $region33: #{csam_forward.3} parent=31 // pred_check
        %p557 = pneg %p126
      $region34: #{csam_forward.3} parent=31 // pred_check_branch
        %559 = sbr.rel (%p557) target = $region36
      $region35: #{csam_forward.3} parent=31 // pred_region
        %s560 = smul.u32 32, %s19
      $region36: #{csam_forward.3} parent=31 // pred_fallthru
        _
    $region32: #{csam_forward.3} parent=5 // pred_fallthru
      _
    %p561 = scmp.le.s32.totalorder 2, %s9
    // Predicated region
    $region37: #{csam_forward.3} parent=5 // pred_check
      %p562 = pneg %p561
    $region38: #{csam_forward.3} parent=5 // pred_check_branch
      %564 = sbr.rel (%p562) target = $region40
    $region39: #{csam_forward.3} parent=5 // pred_region
      %s565 = ssub.s32 %s9, 2
      // Predicated region
      $region41: #{csam_forward.3} parent=39 // pred_check
        %p566 = pneg %p132
      $region42: #{csam_forward.3} parent=39 // pred_check_branch
        %568 = sbr.rel (%p566) target = $region44
      $region43: #{csam_forward.3} parent=39 // pred_region
        %s569 = smul.u32 32, %s21
        %p570 = scmp.lt.s32.totalorder %s20, 0
        %s571 = scalar_select %p570, %s20, 0
        %p572 = scmp.lt.s32.totalorder %s569, 63
        %s573 = scalar_select %p572, %s569, 63
        %s574 = smul.addr %s571, 64
        %s575 = sadd.s32 %s573, %s574
        %s576 = smul.addr %s575, 8
        %s577 = scalar_lea.vmem %s3, %s576
      $region44: #{csam_forward.3} parent=39 // pred_fallthru
        _
    $region40: #{csam_forward.3} parent=5 // pred_fallthru
      _
  $region6: #{csam_forward.3} parent=0 // loop_footer
    %s13 = sadd.s32 1, %s9
  $region7: #{csam_forward.3} parent=0 // loop_footer_branch
    %8 = sbr.rel target = $region3
  $region8: #{csam_forward.3} parent=0 // loop_exit
    _

</llo_original>
